<compile_context>
chip_gen: v5e
topology: v5e:2x2
jax: 0.10.0
libtpu: 0.0.40
codegen_flags: <defaults>
</compile_context>

<pallas_src>
import math

import jax
import jax.numpy as jnp
from jax.experimental import pallas as pl
from jax.experimental.pallas import tpu as pltpu


def _lstm_kernel(xproj_ref,   # (t_chunk, batch_blk, 4H)  x_t @ W_x + b, precomputed
                 wh_ref,      # (H, 4H)                   fused recurrent weights
                 wp_ref,      # (H, NP)                   classifier weights (lane-padded)
                 bp_ref,      # (1, NP)                    classifier bias (lane-padded)
                 out_ref,     # (batch_blk, NP)
                 h_ref, c_ref):
    t_step = pl.program_id(1)

    @pl.when(t_step == 0)
    def _():
        h_ref[...] = jnp.zeros_like(h_ref)
        c_ref[...] = jnp.zeros_like(c_ref)

    H = h_ref.shape[1]
    t_chunk = xproj_ref.shape[0]
    wh = wh_ref[...]

    # Fused-activation constants, hoisted out of the timestep loop.
    # Lane layout of z is [g | i | f | o]; sigmoid(x) = 0.5*tanh(x/2) + 0.5, so
    # one full-(8,128) tanh serves all four gates.
    lane = jax.lax.broadcasted_iota(jnp.int32, (1, 4 * H), 1)
    is_g = lane < H
    scale = jnp.where(is_g, 1.0, 0.5).astype(jnp.float32)   # (1, 4H)
    shift = jnp.where(is_g, 0.0, 0.5).astype(jnp.float32)   # (1, 4H)

    def body(t, carry):
        h, c = carry
        # Single fused gate matmul: (B, H) @ (H, 4H) + precomputed x-projection.
        z = xproj_ref[t] + jnp.dot(h, wh, preferred_element_type=jnp.float32)
        a = jnp.tanh(z * scale)          # ONE full-lane EUP pass for all gates
        gates = scale * a + shift        # g lanes -> tanh(z); i/f/o -> sigmoid(z)
        g = gates[:, 0 * H:1 * H]
        i = gates[:, 1 * H:2 * H]
        f = gates[:, 2 * H:3 * H]
        o = gates[:, 3 * H:4 * H]
        c_new = g * i + c * f
        h_new = jnp.tanh(c_new * o)      # matches the reference module exactly
        return h_new, c_new

    h, c = jax.lax.fori_loop(0, t_chunk, body, (h_ref[...], c_ref[...]),
                             unroll=min(t_chunk, 8))
    h_ref[...] = h
    c_ref[...] = c

    @pl.when(t_step == pl.num_programs(1) - 1)
    def _():
        # Lane-dense (batch_blk, 128*) classifier output; wrapper slices back.
        out_ref[...] = (jnp.dot(h, wp_ref[...],
                                preferred_element_type=jnp.float32)
                        + bp_ref[...])


def init_params(key, input_dim, num_hidden, num_classes):
    """Deterministic synthetic init mirroring the module's __init__."""
    def xavier(k, shape):
        limit = math.sqrt(6.0 / (shape[0] + shape[1]))
        return jax.random.uniform(k, shape, jnp.float32, -limit, limit)

    ks = jax.random.split(key, 9)
    return dict(
        W_gx=xavier(ks[0], (input_dim, num_hidden)),
        W_gh=xavier(ks[1], (num_hidden, num_hidden)),
        b_g=jnp.zeros((num_hidden,), jnp.float32),
        W_ix=xavier(ks[2], (input_dim, num_hidden)),
        W_ih=xavier(ks[3], (num_hidden, num_hidden)),
        b_i=jnp.zeros((num_hidden,), jnp.float32),
        W_fx=xavier(ks[4], (input_dim, num_hidden)),
        W_fh=xavier(ks[5], (num_hidden, num_hidden)),
        b_f=jnp.ones((num_hidden,), jnp.float32),   # forget-gate bias = 1
        W_ox=xavier(ks[6], (input_dim, num_hidden)),
        W_oh=xavier(ks[7], (num_hidden, num_hidden)),
        b_o=jnp.zeros((num_hidden,), jnp.float32),
        W_ph=xavier(ks[8], (num_hidden, num_classes)),
        b_p=jnp.zeros((num_classes,), jnp.float32),
    )


def _fuse_params(params):
    """Pack gate weights column-wise in (g, i, f, o) order."""
    w_x = jnp.concatenate(
        [params["W_gx"], params["W_ix"], params["W_fx"], params["W_ox"]], axis=1)
    w_h = jnp.concatenate(
        [params["W_gh"], params["W_ih"], params["W_fh"], params["W_oh"]], axis=1)
    b = jnp.concatenate(
        [params["b_g"], params["b_i"], params["b_f"], params["b_o"]], axis=0)
    return w_x, w_h, b


def _precompute_x_proj(x, w_x_fused, b_fused, input_dim, num_classes):
    """x_proj[t, b] = x_t @ W_x_fused + b_fused, same branch logic as forward."""
    if input_dim == num_classes:
        # One-hot branch: x_t @ W_x is a row gather of W_x_fused.
        xp = jnp.take(w_x_fused, x.astype(jnp.int32), axis=0)       # (B, S, 4H)
    else:
        # Reference module's `x[:, :, None]` branch only shape-checks when
        # input_dim == 1 (x_t is (B, 1) @ (1, 4H)); anything else would error
        # in the PyTorch module too.
        assert input_dim == 1, "non-one-hot inputs require input_dim == 1"
        xp = x.astype(jnp.float32)[:, :, None] * w_x_fused[0][None, None, :]
    xp = xp + b_fused[None, None, :]
    return jnp.transpose(xp, (1, 0, 2))                              # (S, B, 4H)
    # TODO(synk): for very long sequences on v5e, stream class ids via
    # num_scalar_prefetch and gather W_x rows in-kernel to avoid the (S,B,4H)
    # HBM round trip.


def _pick_t_chunk(seq_length, batch_block, num_hidden):
    """Largest divisor of seq_length <= 128 whose double-buffered x_proj block
    stays under ~8 MiB (safe for v7x's smaller VMEM)."""
    budget = 8 * 1024 * 1024
    best = 1
    for c in range(1, seq_length + 1):
        if seq_length % c:
            continue
        if c <= 128 and 2 * c * batch_block * 4 * num_hidden * 4 <= budget:
            best = c
    return best


def lstm_forward(x, params, *, seq_length, input_dim, num_hidden, num_classes,
                 t_chunk=None, batch_block=None):
    if seq_length == 0:
        # Matches the reference module: h stays h_init = zeros(H).
        return jnp.zeros((num_hidden,), jnp.float32) @ params["W_ph"] + params["b_p"]

    batch = x.shape[0]
    H = num_hidden
    NP = max(128, pl.cdiv(num_classes, 128) * 128)   # lane-dense output width

    w_x, w_h, b = _fuse_params(params)
    x_proj = _precompute_x_proj(x, w_x, b, input_dim, num_classes)  # (S,B,4H) f32

    # Lane-pad classifier head to NP columns (zeros beyond num_classes).
    w_p = jnp.zeros((H, NP), jnp.float32).at[:, :num_classes].set(params["W_ph"])
    b_p = jnp.zeros((1, NP), jnp.float32).at[0, :num_classes].set(params["b_p"])

    # Batch axis is embarrassingly parallel -> split it (v7x has 2 TensorCores);
    # keep blocks sublane-aligned (multiple of 8) or the full batch.
    if batch_block is None:
        batch_block = batch // 2 if (batch % 16 == 0) else batch
    assert batch % batch_block == 0

    if t_chunk is None:
        t_chunk = _pick_t_chunk(seq_length, batch_block, H)
    assert seq_length % t_chunk == 0, "t_chunk must divide seq_length"

    n_b = batch // batch_block
    n_t = seq_length // t_chunk

    out = pl.pallas_call(
        _lstm_kernel,
        out_shape=jax.ShapeDtypeStruct((batch, NP), jnp.float32),
        grid_spec=pltpu.PrefetchScalarGridSpec(
            num_scalar_prefetch=0,
            grid=(n_b, n_t),
            in_specs=[
                pl.BlockSpec((t_chunk, batch_block, 4 * H), lambda bb, s: (s, bb, 0)),
                pl.BlockSpec((H, 4 * H), lambda bb, s: (0, 0)),
                pl.BlockSpec((H, NP), lambda bb, s: (0, 0)),
                pl.BlockSpec((1, NP), lambda bb, s: (0, 0)),
            ],
            out_specs=pl.BlockSpec((batch_block, NP), lambda bb, s: (bb, 0)),
            scratch_shapes=[pltpu.VMEM((batch_block, H), jnp.float32),   # h
                            pltpu.VMEM((batch_block, H), jnp.float32)],  # c
        ),
        compiler_params=pltpu.CompilerParams(
            # Batch blocks are independent; time carries state.
            dimension_semantics=("parallel", "arbitrary")),
    )(x_proj, w_h, w_p, b_p)

    return out[:, :num_classes]


def lstm_reference(x, params, *, seq_length, input_dim, num_classes):
    """Pure-JAX replica of the PyTorch forward for correctness checking."""
    if input_dim == num_classes:
        xe = jax.nn.one_hot(x.astype(jnp.int32), input_dim, dtype=jnp.float32)
    else:
        xe = x.astype(jnp.float32)[:, :, None]
    batch = xe.shape[0]
    H = params["W_gh"].shape[0]
    h = jnp.zeros((batch, H), jnp.float32)
    c = jnp.zeros((batch, H), jnp.float32)
    for t in range(seq_length):
        xt = xe[:, t]
        g = jnp.tanh(xt @ params["W_gx"] + h @ params["W_gh"] + params["b_g"])
        i = jax.nn.sigmoid(xt @ params["W_ix"] + h @ params["W_ih"] + params["b_i"])
        f = jax.nn.sigmoid(xt @ params["W_fx"] + h @ params["W_fh"] + params["b_f"])
        o = jax.nn.sigmoid(xt @ params["W_ox"] + h @ params["W_oh"] + params["b_o"])
        c = g * i + c * f
        h = jnp.tanh(c * o)
    return h @ params["W_ph"] + params["b_p"]


if __name__ == "__main__":
    seq_length = 8
    input_dim = 10     # == num_classes -> one-hot branch of the forward
    num_hidden = 32
    num_classes = 10
    batch = 8

    key = jax.random.PRNGKey(0)
    k_param, k_x = jax.random.split(key)
    params = init_params(k_param, input_dim, num_hidden, num_classes)
    x = jax.random.randint(k_x, (batch, seq_length), 0, num_classes, dtype=jnp.int32)

    out = lstm_forward(x, params, seq_length=seq_length, input_dim=input_dim,
                       num_hidden=num_hidden, num_classes=num_classes)
    out = jax.block_until_ready(out)

    ref = lstm_reference(x, params, seq_length=seq_length, input_dim=input_dim,
                         num_classes=num_classes)
    assert out.shape == (batch, num_classes)
    assert jnp.allclose(out, ref, atol=1e-4, rtol=1e-4), (out, ref)

    print("KERNEL_OK")
</pallas_src>

<mosaic_0001>
module attributes {stable_mosaic.version = 11 : i64} {
  func.func @_lstm_kernel(%arg0: i32, %arg1: i32, %arg2: memref<8x8x128xf32, #tpu.memory_space<vmem>>, %arg3: memref<32x128xf32, #tpu.memory_space<vmem>>, %arg4: memref<32x128xf32, #tpu.memory_space<vmem>>, %arg5: memref<1x128xf32, #tpu.memory_space<vmem>>, %arg6: memref<8x128xf32, #tpu.memory_space<vmem>>, %arg7: memref<8x32xf32, #tpu.memory_space<vmem>>, %arg8: memref<8x32xf32, #tpu.memory_space<vmem>>) attributes {dimension_semantics = [#tpu.dimension_semantics<parallel>, #tpu.dimension_semantics<arbitrary>], iteration_bounds = array<i64: 1, 1>, scalar_prefetch = 0 : i64, scratch_operands = 2 : i64, tpu.core_type = #tpu.core_type<tc>, window_params = [{transform_indices = @transform_0, window_bounds = array<i64: 8, 8, 128>}, {pipeline_mode = #tpu.pipeline_mode<synchronous>, transform_indices = @transform_1, window_bounds = array<i64: 32, 128>}, {pipeline_mode = #tpu.pipeline_mode<synchronous>, transform_indices = @transform_2, window_bounds = array<i64: 32, 128>}, {pipeline_mode = #tpu.pipeline_mode<synchronous>, transform_indices = @transform_3, window_bounds = array<i64: 1, 128>}, {transform_indices = @transform_4, window_bounds = array<i64: 8, 128>}]} {
    %c0_i32 = arith.constant 0 : i32
    %0 = arith.cmpi eq, %arg1, %c0_i32 : i32
    %1 = arith.extui %0 : i1 to i32
    %c0_i32_0 = arith.constant 0 : i32
    %2 = arith.cmpi ne, %1, %c0_i32_0 : i32
    scf.if %2 {
      %cst_40 = arith.constant 0.000000e+00 : f32
      %188 = vector.broadcast %cst_40 : f32 to vector<8x32xf32>
      %c0_41 = arith.constant 0 : index
      %c0_42 = arith.constant 0 : index
      %189 = vector.load %arg7[%c0_41, %c0_42] : memref<8x32xf32, #tpu.memory_space<vmem>>, vector<8x32xf32>
      tpu.vector_store %arg7[%c0_41, %c0_42], %188 {strides = array<i32>} : memref<8x32xf32, #tpu.memory_space<vmem>>, vector<8x32xf32>,
      %cst_43 = arith.constant 0.000000e+00 : f32
      %190 = vector.broadcast %cst_43 : f32 to vector<8x32xf32>
      %c0_44 = arith.constant 0 : index
      %c0_45 = arith.constant 0 : index
      %191 = vector.load %arg8[%c0_44, %c0_45] : memref<8x32xf32, #tpu.memory_space<vmem>>, vector<8x32xf32>
      tpu.vector_store %arg8[%c0_44, %c0_45], %190 {strides = array<i32>} : memref<8x32xf32, #tpu.memory_space<vmem>>, vector<8x32xf32>,
    } else {
    }
    %c0 = arith.constant 0 : index
    %c0_1 = arith.constant 0 : index
    %3 = vector.load %arg3[%c0, %c0_1] : memref<32x128xf32, #tpu.memory_space<vmem>>, vector<32x128xf32>
    %4 = tpu.iota {dimensions = array<i32: 1>} : vector<1x128xi32>
    %c32_i32 = arith.constant 32 : i32
    %5 = vector.broadcast %c32_i32 : i32 to vector<1x128xi32>
    %6 = arith.cmpi slt, %4, %5 : vector<1x128xi32>
    %cst = arith.constant 1.000000e+00 : f32
    %cst_2 = arith.constant 5.000000e-01 : f32
    %7 = vector.broadcast %cst : f32 to vector<1x128xf32>
    %8 = vector.broadcast %cst_2 : f32 to vector<1x128xf32>
    %9 = arith.select %6, %7, %8 : vector<1x128xi1>, vector<1x128xf32>
    %cst_3 = arith.constant 0.000000e+00 : f32
    %cst_4 = arith.constant 5.000000e-01 : f32
    %10 = vector.broadcast %cst_3 : f32 to vector<1x128xf32>
    %11 = vector.broadcast %cst_4 : f32 to vector<1x128xf32>
    %12 = arith.select %6, %10, %11 : vector<1x128xi1>, vector<1x128xf32>
    %c0_5 = arith.constant 0 : index
    %c0_6 = arith.constant 0 : index
    %13 = vector.load %arg7[%c0_5, %c0_6] : memref<8x32xf32, #tpu.memory_space<vmem>>, vector<8x32xf32>
    %c0_7 = arith.constant 0 : index
    %c0_8 = arith.constant 0 : index
    %14 = vector.load %arg8[%c0_7, %c0_8] : memref<8x32xf32, #tpu.memory_space<vmem>>, vector<8x32xf32>
    %c0_i32_9 = arith.constant 0 : i32
    %15 = arith.index_cast %c0_i32_9 : i32 to index
    %c0_10 = arith.constant 0 : index
    %c0_11 = arith.constant 0 : index
    %16 = vector.load %arg2[%15, %c0_10, %c0_11] : memref<8x8x128xf32, #tpu.memory_space<vmem>>, vector<1x8x128xf32>
    %17 = vector.shape_cast %16 : vector<1x8x128xf32> to vector<8x128xf32>
    %cst_12 = arith.constant dense<0.000000e+00> : vector<8x128xf32>
    %18 = tpu.matmul %13, %3, %cst_12 {dimension_numbers = #tpu.dot_dimension_numbers<[1], [0], [0], [1], [0, 0, 1, 1], [], []>} : vector<8x32xf32>, vector<32x128xf32>, vector<8x128xf32> -> vector<8x128xf32>
    %19 = arith.addf %17, %18 : vector<8x128xf32>
    %20 = vector.broadcast %9 : vector<1x128xf32> to vector<8x128xf32>
    %21 = arith.mulf %19, %20 : vector<8x128xf32>
    %22 = math.tanh %21 : vector<8x128xf32>
    %23 = vector.broadcast %9 : vector<1x128xf32> to vector<8x128xf32>
    %24 = arith.mulf %23, %22 : vector<8x128xf32>
    %25 = vector.broadcast %12 : vector<1x128xf32> to vector<8x128xf32>
    %26 = arith.addf %24, %25 : vector<8x128xf32>
    %27 = vector.extract_strided_slice %26 {offsets = [0, 0], sizes = [8, 32], strides = [1, 1]} : vector<8x128xf32> to vector<8x32xf32>
    %28 = vector.extract_strided_slice %26 {offsets = [0, 32], sizes = [8, 32], strides = [1, 1]} : vector<8x128xf32> to vector<8x32xf32>
    %29 = vector.extract_strided_slice %26 {offsets = [0, 64], sizes = [8, 32], strides = [1, 1]} : vector<8x128xf32> to vector<8x32xf32>
    %30 = vector.extract_strided_slice %26 {offsets = [0, 96], sizes = [8, 32], strides = [1, 1]} : vector<8x128xf32> to vector<8x32xf32>
    %31 = arith.mulf %27, %28 : vector<8x32xf32>
    %32 = arith.mulf %14, %29 : vector<8x32xf32>
    %33 = arith.addf %31, %32 : vector<8x32xf32>
    %34 = arith.mulf %33, %30 : vector<8x32xf32>
    %35 = math.tanh %34 : vector<8x32xf32>
    %c1_i32 = arith.constant 1 : i32
    %36 = arith.index_cast %c1_i32 : i32 to index
    %c0_13 = arith.constant 0 : index
    %c0_14 = arith.constant 0 : index
    %37 = vector.load %arg2[%36, %c0_13, %c0_14] : memref<8x8x128xf32, #tpu.memory_space<vmem>>, vector<1x8x128xf32>
    %38 = vector.shape_cast %37 : vector<1x8x128xf32> to vector<8x128xf32>
    %cst_15 = arith.constant dense<0.000000e+00> : vector<8x128xf32>
    %39 = tpu.matmul %35, %3, %cst_15 {dimension_numbers = #tpu.dot_dimension_numbers<[1], [0], [0], [1], [0, 0, 1, 1], [], []>} : vector<8x32xf32>, vector<32x128xf32>, vector<8x128xf32> -> vector<8x128xf32>
    %40 = arith.addf %38, %39 : vector<8x128xf32>
    %41 = vector.broadcast %9 : vector<1x128xf32> to vector<8x128xf32>
    %42 = arith.mulf %40, %41 : vector<8x128xf32>
    %43 = math.tanh %42 : vector<8x128xf32>
    %44 = vector.broadcast %9 : vector<1x128xf32> to vector<8x128xf32>
    %45 = arith.mulf %44, %43 : vector<8x128xf32>
    %46 = vector.broadcast %12 : vector<1x128xf32> to vector<8x128xf32>
    %47 = arith.addf %45, %46 : vector<8x128xf32>
    %48 = vector.extract_strided_slice %47 {offsets = [0, 0], sizes = [8, 32], strides = [1, 1]} : vector<8x128xf32> to vector<8x32xf32>
    %49 = vector.extract_strided_slice %47 {offsets = [0, 32], sizes = [8, 32], strides = [1, 1]} : vector<8x128xf32> to vector<8x32xf32>
    %50 = vector.extract_strided_slice %47 {offsets = [0, 64], sizes = [8, 32], strides = [1, 1]} : vector<8x128xf32> to vector<8x32xf32>
    %51 = vector.extract_strided_slice %47 {offsets = [0, 96], sizes = [8, 32], strides = [1, 1]} : vector<8x128xf32> to vector<8x32xf32>
    %52 = arith.mulf %48, %49 : vector<8x32xf32>
    %53 = arith.mulf %33, %50 : vector<8x32xf32>
    %54 = arith.addf %52, %53 : vector<8x32xf32>
    %55 = arith.mulf %54, %51 : vector<8x32xf32>
    %56 = math.tanh %55 : vector<8x32xf32>
    %c2_i32 = arith.constant 2 : i32
    %57 = arith.index_cast %c2_i32 : i32 to index
    %c0_16 = arith.constant 0 : index
    %c0_17 = arith.constant 0 : index
    %58 = vector.load %arg2[%57, %c0_16, %c0_17] : memref<8x8x128xf32, #tpu.memory_space<vmem>>, vector<1x8x128xf32>
    %59 = vector.shape_cast %58 : vector<1x8x128xf32> to vector<8x128xf32>
    %cst_18 = arith.constant dense<0.000000e+00> : vector<8x128xf32>
    %60 = tpu.matmul %56, %3, %cst_18 {dimension_numbers = #tpu.dot_dimension_numbers<[1], [0], [0], [1], [0, 0, 1, 1], [], []>} : vector<8x32xf32>, vector<32x128xf32>, vector<8x128xf32> -> vector<8x128xf32>
    %61 = arith.addf %59, %60 : vector<8x128xf32>
    %62 = vector.broadcast %9 : vector<1x128xf32> to vector<8x128xf32>
    %63 = arith.mulf %61, %62 : vector<8x128xf32>
    %64 = math.tanh %63 : vector<8x128xf32>
    %65 = vector.broadcast %9 : vector<1x128xf32> to vector<8x128xf32>
    %66 = arith.mulf %65, %64 : vector<8x128xf32>
    %67 = vector.broadcast %12 : vector<1x128xf32> to vector<8x128xf32>
    %68 = arith.addf %66, %67 : vector<8x128xf32>
    %69 = vector.extract_strided_slice %68 {offsets = [0, 0], sizes = [8, 32], strides = [1, 1]} : vector<8x128xf32> to vector<8x32xf32>
    %70 = vector.extract_strided_slice %68 {offsets = [0, 32], sizes = [8, 32], strides = [1, 1]} : vector<8x128xf32> to vector<8x32xf32>
    %71 = vector.extract_strided_slice %68 {offsets = [0, 64], sizes = [8, 32], strides = [1, 1]} : vector<8x128xf32> to vector<8x32xf32>
    %72 = vector.extract_strided_slice %68 {offsets = [0, 96], sizes = [8, 32], strides = [1, 1]} : vector<8x128xf32> to vector<8x32xf32>
    %73 = arith.mulf %69, %70 : vector<8x32xf32>
    %74 = arith.mulf %54, %71 : vector<8x32xf32>
    %75 = arith.addf %73, %74 : vector<8x32xf32>
    %76 = arith.mulf %75, %72 : vector<8x32xf32>
    %77 = math.tanh %76 : vector<8x32xf32>
    %c3_i32 = arith.constant 3 : i32
    %78 = arith.index_cast %c3_i32 : i32 to index
    %c0_19 = arith.constant 0 : index
    %c0_20 = arith.constant 0 : index
    %79 = vector.load %arg2[%78, %c0_19, %c0_20] : memref<8x8x128xf32, #tpu.memory_space<vmem>>, vector<1x8x128xf32>
    %80 = vector.shape_cast %79 : vector<1x8x128xf32> to vector<8x128xf32>
    %cst_21 = arith.constant dense<0.000000e+00> : vector<8x128xf32>
    %81 = tpu.matmul %77, %3, %cst_21 {dimension_numbers = #tpu.dot_dimension_numbers<[1], [0], [0], [1], [0, 0, 1, 1], [], []>} : vector<8x32xf32>, vector<32x128xf32>, vector<8x128xf32> -> vector<8x128xf32>
    %82 = arith.addf %80, %81 : vector<8x128xf32>
    %83 = vector.broadcast %9 : vector<1x128xf32> to vector<8x128xf32>
    %84 = arith.mulf %82, %83 : vector<8x128xf32>
    %85 = math.tanh %84 : vector<8x128xf32>
    %86 = vector.broadcast %9 : vector<1x128xf32> to vector<8x128xf32>
    %87 = arith.mulf %86, %85 : vector<8x128xf32>
    %88 = vector.broadcast %12 : vector<1x128xf32> to vector<8x128xf32>
    %89 = arith.addf %87, %88 : vector<8x128xf32>
    %90 = vector.extract_strided_slice %89 {offsets = [0, 0], sizes = [8, 32], strides = [1, 1]} : vector<8x128xf32> to vector<8x32xf32>
    %91 = vector.extract_strided_slice %89 {offsets = [0, 32], sizes = [8, 32], strides = [1, 1]} : vector<8x128xf32> to vector<8x32xf32>
    %92 = vector.extract_strided_slice %89 {offsets = [0, 64], sizes = [8, 32], strides = [1, 1]} : vector<8x128xf32> to vector<8x32xf32>
    %93 = vector.extract_strided_slice %89 {offsets = [0, 96], sizes = [8, 32], strides = [1, 1]} : vector<8x128xf32> to vector<8x32xf32>
    %94 = arith.mulf %90, %91 : vector<8x32xf32>
    %95 = arith.mulf %75, %92 : vector<8x32xf32>
    %96 = arith.addf %94, %95 : vector<8x32xf32>
    %97 = arith.mulf %96, %93 : vector<8x32xf32>
    %98 = math.tanh %97 : vector<8x32xf32>
    %c4_i32 = arith.constant 4 : i32
    %99 = arith.index_cast %c4_i32 : i32 to index
    %c0_22 = arith.constant 0 : index
    %c0_23 = arith.constant 0 : index
    %100 = vector.load %arg2[%99, %c0_22, %c0_23] : memref<8x8x128xf32, #tpu.memory_space<vmem>>, vector<1x8x128xf32>
    %101 = vector.shape_cast %100 : vector<1x8x128xf32> to vector<8x128xf32>
    %cst_24 = arith.constant dense<0.000000e+00> : vector<8x128xf32>
    %102 = tpu.matmul %98, %3, %cst_24 {dimension_numbers = #tpu.dot_dimension_numbers<[1], [0], [0], [1], [0, 0, 1, 1], [], []>} : vector<8x32xf32>, vector<32x128xf32>, vector<8x128xf32> -> vector<8x128xf32>
    %103 = arith.addf %101, %102 : vector<8x128xf32>
    %104 = vector.broadcast %9 : vector<1x128xf32> to vector<8x128xf32>
    %105 = arith.mulf %103, %104 : vector<8x128xf32>
    %106 = math.tanh %105 : vector<8x128xf32>
    %107 = vector.broadcast %9 : vector<1x128xf32> to vector<8x128xf32>
    %108 = arith.mulf %107, %106 : vector<8x128xf32>
    %109 = vector.broadcast %12 : vector<1x128xf32> to vector<8x128xf32>
    %110 = arith.addf %108, %109 : vector<8x128xf32>
    %111 = vector.extract_strided_slice %110 {offsets = [0, 0], sizes = [8, 32], strides = [1, 1]} : vector<8x128xf32> to vector<8x32xf32>
    %112 = vector.extract_strided_slice %110 {offsets = [0, 32], sizes = [8, 32], strides = [1, 1]} : vector<8x128xf32> to vector<8x32xf32>
    %113 = vector.extract_strided_slice %110 {offsets = [0, 64], sizes = [8, 32], strides = [1, 1]} : vector<8x128xf32> to vector<8x32xf32>
    %114 = vector.extract_strided_slice %110 {offsets = [0, 96], sizes = [8, 32], strides = [1, 1]} : vector<8x128xf32> to vector<8x32xf32>
    %115 = arith.mulf %111, %112 : vector<8x32xf32>
    %116 = arith.mulf %96, %113 : vector<8x32xf32>
    %117 = arith.addf %115, %116 : vector<8x32xf32>
    %118 = arith.mulf %117, %114 : vector<8x32xf32>
    %119 = math.tanh %118 : vector<8x32xf32>
    %c5_i32 = arith.constant 5 : i32
    %120 = arith.index_cast %c5_i32 : i32 to index
    %c0_25 = arith.constant 0 : index
    %c0_26 = arith.constant 0 : index
    %121 = vector.load %arg2[%120, %c0_25, %c0_26] : memref<8x8x128xf32, #tpu.memory_space<vmem>>, vector<1x8x128xf32>
    %122 = vector.shape_cast %121 : vector<1x8x128xf32> to vector<8x128xf32>
    %cst_27 = arith.constant dense<0.000000e+00> : vector<8x128xf32>
    %123 = tpu.matmul %119, %3, %cst_27 {dimension_numbers = #tpu.dot_dimension_numbers<[1], [0], [0], [1], [0, 0, 1, 1], [], []>} : vector<8x32xf32>, vector<32x128xf32>, vector<8x128xf32> -> vector<8x128xf32>
    %124 = arith.addf %122, %123 : vector<8x128xf32>
    %125 = vector.broadcast %9 : vector<1x128xf32> to vector<8x128xf32>
    %126 = arith.mulf %124, %125 : vector<8x128xf32>
    %127 = math.tanh %126 : vector<8x128xf32>
    %128 = vector.broadcast %9 : vector<1x128xf32> to vector<8x128xf32>
    %129 = arith.mulf %128, %127 : vector<8x128xf32>
    %130 = vector.broadcast %12 : vector<1x128xf32> to vector<8x128xf32>
    %131 = arith.addf %129, %130 : vector<8x128xf32>
    %132 = vector.extract_strided_slice %131 {offsets = [0, 0], sizes = [8, 32], strides = [1, 1]} : vector<8x128xf32> to vector<8x32xf32>
    %133 = vector.extract_strided_slice %131 {offsets = [0, 32], sizes = [8, 32], strides = [1, 1]} : vector<8x128xf32> to vector<8x32xf32>
    %134 = vector.extract_strided_slice %131 {offsets = [0, 64], sizes = [8, 32], strides = [1, 1]} : vector<8x128xf32> to vector<8x32xf32>
    %135 = vector.extract_strided_slice %131 {offsets = [0, 96], sizes = [8, 32], strides = [1, 1]} : vector<8x128xf32> to vector<8x32xf32>
    %136 = arith.mulf %132, %133 : vector<8x32xf32>
    %137 = arith.mulf %117, %134 : vector<8x32xf32>
    %138 = arith.addf %136, %137 : vector<8x32xf32>
    %139 = arith.mulf %138, %135 : vector<8x32xf32>
    %140 = math.tanh %139 : vector<8x32xf32>
    %c6_i32 = arith.constant 6 : i32
    %141 = arith.index_cast %c6_i32 : i32 to index
    %c0_28 = arith.constant 0 : index
    %c0_29 = arith.constant 0 : index
    %142 = vector.load %arg2[%141, %c0_28, %c0_29] : memref<8x8x128xf32, #tpu.memory_space<vmem>>, vector<1x8x128xf32>
    %143 = vector.shape_cast %142 : vector<1x8x128xf32> to vector<8x128xf32>
    %cst_30 = arith.constant dense<0.000000e+00> : vector<8x128xf32>
    %144 = tpu.matmul %140, %3, %cst_30 {dimension_numbers = #tpu.dot_dimension_numbers<[1], [0], [0], [1], [0, 0, 1, 1], [], []>} : vector<8x32xf32>, vector<32x128xf32>, vector<8x128xf32> -> vector<8x128xf32>
    %145 = arith.addf %143, %144 : vector<8x128xf32>
    %146 = vector.broadcast %9 : vector<1x128xf32> to vector<8x128xf32>
    %147 = arith.mulf %145, %146 : vector<8x128xf32>
    %148 = math.tanh %147 : vector<8x128xf32>
    %149 = vector.broadcast %9 : vector<1x128xf32> to vector<8x128xf32>
    %150 = arith.mulf %149, %148 : vector<8x128xf32>
    %151 = vector.broadcast %12 : vector<1x128xf32> to vector<8x128xf32>
    %152 = arith.addf %150, %151 : vector<8x128xf32>
    %153 = vector.extract_strided_slice %152 {offsets = [0, 0], sizes = [8, 32], strides = [1, 1]} : vector<8x128xf32> to vector<8x32xf32>
    %154 = vector.extract_strided_slice %152 {offsets = [0, 32], sizes = [8, 32], strides = [1, 1]} : vector<8x128xf32> to vector<8x32xf32>
    %155 = vector.extract_strided_slice %152 {offsets = [0, 64], sizes = [8, 32], strides = [1, 1]} : vector<8x128xf32> to vector<8x32xf32>
    %156 = vector.extract_strided_slice %152 {offsets = [0, 96], sizes = [8, 32], strides = [1, 1]} : vector<8x128xf32> to vector<8x32xf32>
    %157 = arith.mulf %153, %154 : vector<8x32xf32>
    %158 = arith.mulf %138, %155 : vector<8x32xf32>
    %159 = arith.addf %157, %158 : vector<8x32xf32>
    %160 = arith.mulf %159, %156 : vector<8x32xf32>
    %161 = math.tanh %160 : vector<8x32xf32>
    %c7_i32 = arith.constant 7 : i32
    %162 = arith.index_cast %c7_i32 : i32 to index
    %c0_31 = arith.constant 0 : index
    %c0_32 = arith.constant 0 : index
    %163 = vector.load %arg2[%162, %c0_31, %c0_32] : memref<8x8x128xf32, #tpu.memory_space<vmem>>, vector<1x8x128xf32>
    %164 = vector.shape_cast %163 : vector<1x8x128xf32> to vector<8x128xf32>
    %cst_33 = arith.constant dense<0.000000e+00> : vector<8x128xf32>
    %165 = tpu.matmul %161, %3, %cst_33 {dimension_numbers = #tpu.dot_dimension_numbers<[1], [0], [0], [1], [0, 0, 1, 1], [], []>} : vector<8x32xf32>, vector<32x128xf32>, vector<8x128xf32> -> vector<8x128xf32>
    %166 = arith.addf %164, %165 : vector<8x128xf32>
    %167 = vector.broadcast %9 : vector<1x128xf32> to vector<8x128xf32>
    %168 = arith.mulf %166, %167 : vector<8x128xf32>
    %169 = math.tanh %168 : vector<8x128xf32>
    %170 = vector.broadcast %9 : vector<1x128xf32> to vector<8x128xf32>
    %171 = arith.mulf %170, %169 : vector<8x128xf32>
    %172 = vector.broadcast %12 : vector<1x128xf32> to vector<8x128xf32>
    %173 = arith.addf %171, %172 : vector<8x128xf32>
    %174 = vector.extract_strided_slice %173 {offsets = [0, 0], sizes = [8, 32], strides = [1, 1]} : vector<8x128xf32> to vector<8x32xf32>
    %175 = vector.extract_strided_slice %173 {offsets = [0, 32], sizes = [8, 32], strides = [1, 1]} : vector<8x128xf32> to vector<8x32xf32>
    %176 = vector.extract_strided_slice %173 {offsets = [0, 64], sizes = [8, 32], strides = [1, 1]} : vector<8x128xf32> to vector<8x32xf32>
    %177 = vector.extract_strided_slice %173 {offsets = [0, 96], sizes = [8, 32], strides = [1, 1]} : vector<8x128xf32> to vector<8x32xf32>
    %178 = arith.mulf %174, %175 : vector<8x32xf32>
    %179 = arith.mulf %159, %176 : vector<8x32xf32>
    %180 = arith.addf %178, %179 : vector<8x32xf32>
    %181 = arith.mulf %180, %177 : vector<8x32xf32>
    %182 = math.tanh %181 : vector<8x32xf32>
    %c8_i32 = arith.constant 8 : i32
    %c0_34 = arith.constant 0 : index
    %c0_35 = arith.constant 0 : index
    %183 = vector.load %arg7[%c0_34, %c0_35] : memref<8x32xf32, #tpu.memory_space<vmem>>, vector<8x32xf32>
    tpu.vector_store %arg7[%c0_34, %c0_35], %182 {strides = array<i32>} : memref<8x32xf32, #tpu.memory_space<vmem>>, vector<8x32xf32>,
    %c0_36 = arith.constant 0 : index
    %c0_37 = arith.constant 0 : index
    %184 = vector.load %arg8[%c0_36, %c0_37] : memref<8x32xf32, #tpu.memory_space<vmem>>, vector<8x32xf32>
    tpu.vector_store %arg8[%c0_36, %c0_37], %180 {strides = array<i32>} : memref<8x32xf32, #tpu.memory_space<vmem>>, vector<8x32xf32>,
    %c0_i32_38 = arith.constant 0 : i32
    %185 = arith.cmpi eq, %arg1, %c0_i32_38 : i32
    %186 = arith.extui %185 : i1 to i32
    %c0_i32_39 = arith.constant 0 : i32
    %187 = arith.cmpi ne, %186, %c0_i32_39 : i32
    scf.if %187 {
      %c0_40 = arith.constant 0 : index
      %c0_41 = arith.constant 0 : index
      %188 = vector.load %arg4[%c0_40, %c0_41] : memref<32x128xf32, #tpu.memory_space<vmem>>, vector<32x128xf32>
      %cst_42 = arith.constant dense<0.000000e+00> : vector<8x128xf32>
      %189 = tpu.matmul %182, %188, %cst_42 {dimension_numbers = #tpu.dot_dimension_numbers<[1], [0], [0], [1], [0, 0, 1, 1], [], []>} : vector<8x32xf32>, vector<32x128xf32>, vector<8x128xf32> -> vector<8x128xf32>
      %c0_43 = arith.constant 0 : index
      %c0_44 = arith.constant 0 : index
      %190 = vector.load %arg5[%c0_43, %c0_44] : memref<1x128xf32, #tpu.memory_space<vmem>>, vector<1x128xf32>
      %191 = vector.broadcast %190 : vector<1x128xf32> to vector<8x128xf32>
      %192 = arith.addf %189, %191 : vector<8x128xf32>
      %c0_45 = arith.constant 0 : index
      %c0_46 = arith.constant 0 : index
      %193 = vector.load %arg6[%c0_45, %c0_46] : memref<8x128xf32, #tpu.memory_space<vmem>>, vector<8x128xf32>
      tpu.vector_store %arg6[%c0_45, %c0_46], %192 {strides = array<i32>} : memref<8x128xf32, #tpu.memory_space<vmem>>, vector<8x128xf32>,
    } else {
    }
    return
  }
  func.func @transform_0(%arg0: i32, %arg1: i32) -> (i32, i32, i32) {
    %c0_i32 = arith.constant 0 : i32
    %c0_i32_0 = arith.constant 0 : i32
    return %arg1, %arg0, %c0_i32 : i32, i32, i32
  }
  func.func @transform_1(%arg0: i32, %arg1: i32) -> (i32, i32) {
    %c0_i32 = arith.constant 0 : i32
    %c0_i32_0 = arith.constant 0 : i32
    %c0_i32_1 = arith.constant 0 : i32
    return %c0_i32, %c0_i32_0 : i32, i32
  }
  func.func @transform_2(%arg0: i32, %arg1: i32) -> (i32, i32) {
    %c0_i32 = arith.constant 0 : i32
    %c0_i32_0 = arith.constant 0 : i32
    %c0_i32_1 = arith.constant 0 : i32
    return %c0_i32, %c0_i32_0 : i32, i32
  }
  func.func @transform_3(%arg0: i32, %arg1: i32) -> (i32, i32) {
    %c0_i32 = arith.constant 0 : i32
    %c0_i32_0 = arith.constant 0 : i32
    %c0_i32_1 = arith.constant 0 : i32
    return %c0_i32, %c0_i32_0 : i32, i32
  }
  func.func @transform_4(%arg0: i32, %arg1: i32) -> (i32, i32) {
    %c0_i32 = arith.constant 0 : i32
    %c0_i32_0 = arith.constant 0 : i32
    return %arg0, %c0_i32 : i32, i32
  }
}

</mosaic_0001>

<llo_original>
// kernel: tpu_custom_call.1
$region0: #{tpu_custom_call.1}
  #allocation0 [shape = 'u32[]', space=smem, size = 0x4, offset = 0x4, fixed_abs, tag = 'smem constant byte address 0x4 - core index']
  #allocation1 [shape = 'u32[72,128]{1,0:T(1,128)}', space=vmem, size = 0x9000, scoped, tag = 'internal scratch']
  #allocation2 [shape = 'f32[8,32]{1,0:T(8,128)}', space=vmem, size = 0x1000, scoped, tag = 'scratch operand']
  #allocation3 [shape = 'f32[8,32]{1,0:T(8,128)}', space=vmem, size = 0x1000, scoped, tag = 'scratch operand']
  %s0 = inlined_call_operand.hbm [shape: f32[8,8,128], index: 0, kind: input, shape index: {}]
  %s1 = inlined_call_operand.hbm [shape: f32[32,128], index: 1, kind: input, shape index: {}]
  %s2 = inlined_call_operand.hbm [shape: f32[32,128], index: 2, kind: input, shape index: {}]
  %s3 = inlined_call_operand.vmem [shape: f32[1,128], index: 3, kind: input, shape index: {}]
  %s4 = inlined_call_operand.hbm [shape: f32[8,128], index: 4, kind: output, shape index: {}]
  %s5 = sld [smem:[#allocation0]]
  $region46: #{tpu_custom_call.1} parent=0
    _
  %s7 = ssub.s32 1, %s5
  %s8 = scalar_select 0, %s7, %s5
  $region1: #{tpu_custom_call.1} parent=0
    #allocation4 [shape = 'u8[32768]{0}', space=vmem, size = 0x8000, scoped, tag = 'input window, operand 0, single buffered']
    #allocation5 [shape = 's32[1]{0}', space=sflag, size = 0x4, scoped, tag = 'scoped memory for tpu_custom_call.1']
    #allocation6 [shape = 's32[1]{0}', space=sflag, size = 0x4, scoped, tag = 'scoped memory for tpu_custom_call.1']
    #allocation7 [shape = 'u8[16384]{0}', space=vmem, size = 0x4000, scoped, tag = 'input window, operand 1, single buffered']
    #allocation8 [shape = 's32[1]{0}', space=sflag, size = 0x4, scoped, tag = 'scoped memory for tpu_custom_call.1']
    #allocation9 [shape = 'u8[16384]{0}', space=vmem, size = 0x4000, scoped, tag = 'input window, operand 2, single buffered']
    #allocation10 [shape = 'u8[4096]{0}', space=vmem, size = 0x1000, scoped, tag = 'output window, operand 0, single buffered']
    %9 = vsyncpa [#allocation5], 0
    %10 = vsyncpa [#allocation8], 0
    %11 = vsyncpa [#allocation6], 0
    // Predicated region
    $region2: #{tpu_custom_call.1} parent=1 // pred_check
      _
    $region3: #{tpu_custom_call.1} parent=1 // pred_check_branch
      %13 = sbr.rel (0) target = $region5
    $region4: #{tpu_custom_call.1} parent=1 // pred_region
      %15 = vsyncadd [#allocation5], 0
      %s16 = sshll.u32 %s0, 4
      %s17 = int_to_ptr.hbm [resolvable:$true] %s16
      %s18 = sshll.u32 [#allocation4], 4
      %s19 = int_to_ptr.vmem [resolvable:$true] %s18
      %24 = dma.hbm_to_vmem [thread:$0]  %s17, 1024, %s19, [#allocation5], 128, 128, 8
    $region5: #{tpu_custom_call.1} parent=1 // pred_fallthru
      _
    // Predicated region
    $region6: #{tpu_custom_call.1} parent=1 // pred_check
      _
    $region7: #{tpu_custom_call.1} parent=1 // pred_check_branch
      %26 = sbr.rel (0) target = $region9
    $region8: #{tpu_custom_call.1} parent=1 // pred_region
      %28 = vsyncadd [#allocation8], 0
      %s29 = sshll.u32 %s1, 4
      %s30 = int_to_ptr.hbm [resolvable:$true] %s29
      %s31 = sshll.u32 [#allocation7], 4
      %s32 = int_to_ptr.vmem [resolvable:$true] %s31
      %37 = dma.hbm_to_vmem [thread:$0]  %s30, 512, %s32, [#allocation8], 128, 128, 8
    $region9: #{tpu_custom_call.1} parent=1 // pred_fallthru
      _
    // Predicated region
    $region10: #{tpu_custom_call.1} parent=1 // pred_check
      _
    $region11: #{tpu_custom_call.1} parent=1 // pred_check_branch
      %39 = sbr.rel (0) target = $region13
    $region12: #{tpu_custom_call.1} parent=1 // pred_region
      %41 = vsyncadd [#allocation8], 0
      %s42 = sshll.u32 %s2, 4
      %s43 = int_to_ptr.hbm [resolvable:$true] %s42
      %s44 = sshll.u32 [#allocation9], 4
      %s45 = int_to_ptr.vmem [resolvable:$true] %s44
      %50 = dma.hbm_to_vmem [thread:$0]  %s43, 512, %s45, [#allocation8], 128, 128, 8
    $region13: #{tpu_custom_call.1} parent=1 // pred_fallthru
      _
    // Predicated region
    $region14: #{tpu_custom_call.1} parent=1 // pred_check
      _
    $region15: #{tpu_custom_call.1} parent=1 // pred_check_branch
      %52 = sbr.rel (0) target = $region17
    $region16: #{tpu_custom_call.1} parent=1 // pred_region
      _
    $region17: #{tpu_custom_call.1} parent=1 // pred_fallthru
      _
    // Predicated region
    $region18: #{tpu_custom_call.1} parent=1 // pred_check
      _
    $region19: #{tpu_custom_call.1} parent=1 // pred_check_branch
      %54 = sbr.rel (0) target = $region21
    $region20: #{tpu_custom_call.1} parent=1 // pred_region
      %56 = dma.done [#allocation5], 1024
    $region21: #{tpu_custom_call.1} parent=1 // pred_fallthru
      _
    // Predicated region
    $region22: #{tpu_custom_call.1} parent=1 // pred_check
      _
    $region23: #{tpu_custom_call.1} parent=1 // pred_check_branch
      %58 = sbr.rel (0) target = $region25
    $region24: #{tpu_custom_call.1} parent=1 // pred_region
      %60 = dma.done [#allocation8], 512
    $region25: #{tpu_custom_call.1} parent=1 // pred_fallthru
      _
    // Predicated region
    $region26: #{tpu_custom_call.1} parent=1 // pred_check
      _
    $region27: #{tpu_custom_call.1} parent=1 // pred_check_branch
      %62 = sbr.rel (0) target = $region29
    $region28: #{tpu_custom_call.1} parent=1 // pred_region
      %64 = dma.done [#allocation8], 512
    $region29: #{tpu_custom_call.1} parent=1 // pred_fallthru
      _
    %p65 = scmp.eq.s32.totalorder 0, 0
    // Predicated region
    $region30: #{tpu_custom_call.1} parent=1 // pred_check
      %p66 = pneg %p65
    $region31: #{tpu_custom_call.1} parent=1 // pred_check_branch
      %68 = sbr.rel (%p66) target = $region33
    $region32: #{tpu_custom_call.1} parent=1 // pred_region
      %vm69 = vcmask 261120
      %70 = vst.msk [vmem:[#allocation2] sm:$0xff] %vm69, 0.0
      %71 = vst.msk [vmem:[#allocation3] sm:$0xff] %vm69, 0.0
    $region33: #{tpu_custom_call.1} parent=1 // pred_fallthru
      _
    %v72 = vld [vmem:[#allocation7] sm:$0xff]
    %v73 = vld [vmem:[#allocation7 + $0x8] sm:$0xff]
    %v74 = vld [vmem:[#allocation7 + $0x10] sm:$0xff]
    %v75 = vld [vmem:[#allocation7 + $0x18] sm:$0xff]
    %v76 = vlaneseq
    %v77 = vand.u32 %v76, 127
    %vm78 = vcmp.lt.s32.totalorder %v77, 32
    %v79 = vsel %vm78, 1.0, 0.5
    %v80 = vsel %vm78, 0.0, 0.5
    %v81 = vld [vmem:[#allocation2] sm:$0xff]
    %v82 = vld [vmem:[#allocation3] sm:$0xff]
    %v83 = vld [vmem:[#allocation4] sm:$0xff]
    %vm84 = vcmask 261120
    %v86 = vsel %vm84, %v81, 0
    %88 = vmatpush.msra.mxu0 0.0
    %89 = vmatpush.msra.mxu0 0.0
    %90 = vmatpush.msra.mxu0 0.0
    %91 = vmatpush.msra.mxu0 0.0
    %92 = vmatpush.msra.mxu0 0.0
    %93 = vmatpush.msra.mxu0 0.0
    %94 = vmatpush.msra.mxu0 0.0
    %95 = vmatpush.msra.mxu0 0.0
    %96 = vmatpush.msra.mxu0 0.0
    %97 = vmatpush.msra.mxu0 0.0
    %98 = vmatpush.msra.mxu0 0.0
    %99 = vmatpush.msra.mxu0 0.0
    %100 = vmatpush.msra.mxu0 %v75
    %101 = vmatpush.msra.mxu0 %v74
    %102 = vmatpush.msra.mxu0 %v73
    %103 = vmatpush.msra.mxu0 %v72
    %104 = vmatmul.f32.gmra.mxu0 %v86
    %v105 = vpop.f32.mrf.mxu0
    %v106 = vadd.f32 0.0, %v105
    %107 = vdwg.mxu0
    %v108 = vadd.f32 %v83, %v106
    %v109 = vmul.f32 %v108, %v79
    %v110 = vtanh.pop %v109
    %v111 = vmul.f32 %v79, %v110
    %v112 = vadd.f32 %v111, %v80
    %114 = vrot.lane.b32.xlu0 %v112, 96
    %v115 = vpop.permute.xlu0 %114
    %v117 = vmul.f32 %v112, %v115
    %118 = vrot.lane.b32.xlu0 %v112, 64
    %v119 = vpop.permute.xlu0 %118
    %v121 = vmul.f32 %v82, %v119
    %v122 = vadd.f32 %v117, %v121
    %123 = vrot.lane.b32.xlu0 %v112, 32
    %v124 = vpop.permute.xlu0 %123
    %v126 = vmul.f32 %v122, %v124
    %v127 = vtanh.pop %v126
    %s128 = scalar_lea.vmem [#allocation4], 8
    %v129 = vld [vmem:[%s128] sm:$0xff]
    %v131 = vsel %vm84, %v127, 0
    %133 = vmatpush.msra.mxu0 0.0
    %134 = vmatpush.msra.mxu0 0.0
    %135 = vmatpush.msra.mxu0 0.0
    %136 = vmatpush.msra.mxu0 0.0
    %137 = vmatpush.msra.mxu0 0.0
    %138 = vmatpush.msra.mxu0 0.0
    %139 = vmatpush.msra.mxu0 0.0
    %140 = vmatpush.msra.mxu0 0.0
    %141 = vmatpush.msra.mxu0 0.0
    %142 = vmatpush.msra.mxu0 0.0
    %143 = vmatpush.msra.mxu0 0.0
    %144 = vmatpush.msra.mxu0 0.0
    %145 = vmatpush.msra.mxu0 %v75
    %146 = vmatpush.msra.mxu0 %v74
    %147 = vmatpush.msra.mxu0 %v73
    %148 = vmatpush.msra.mxu0 %v72
    %149 = vmatmul.f32.gmra.mxu0 %v131
    %v150 = vpop.f32.mrf.mxu0
    %v151 = vadd.f32 0.0, %v150
    %152 = vdwg.mxu0
    %v153 = vadd.f32 %v129, %v151
    %v154 = vmul.f32 %v153, %v79
    %v155 = vtanh.pop %v154
    %v156 = vmul.f32 %v79, %v155
    %v157 = vadd.f32 %v156, %v80
    %159 = vrot.lane.b32.xlu0 %v157, 96
    %v160 = vpop.permute.xlu0 %159
    %v162 = vmul.f32 %v157, %v160
    %163 = vrot.lane.b32.xlu0 %v157, 64
    %v164 = vpop.permute.xlu0 %163
    %v166 = vmul.f32 %v122, %v164
    %v167 = vadd.f32 %v162, %v166
    %168 = vrot.lane.b32.xlu0 %v157, 32
    %v169 = vpop.permute.xlu0 %168
    %v171 = vmul.f32 %v167, %v169
    %v172 = vtanh.pop %v171
    %s173 = scalar_lea.vmem [#allocation4], 16
    %v174 = vld [vmem:[%s173] sm:$0xff]
    %v176 = vsel %vm84, %v172, 0
    %178 = vmatpush.msra.mxu0 0.0
    %179 = vmatpush.msra.mxu0 0.0
    %180 = vmatpush.msra.mxu0 0.0
    %181 = vmatpush.msra.mxu0 0.0
    %182 = vmatpush.msra.mxu0 0.0
    %183 = vmatpush.msra.mxu0 0.0
    %184 = vmatpush.msra.mxu0 0.0
    %185 = vmatpush.msra.mxu0 0.0
    %186 = vmatpush.msra.mxu0 0.0
    %187 = vmatpush.msra.mxu0 0.0
    %188 = vmatpush.msra.mxu0 0.0
    %189 = vmatpush.msra.mxu0 0.0
    %190 = vmatpush.msra.mxu0 %v75
    %191 = vmatpush.msra.mxu0 %v74
    %192 = vmatpush.msra.mxu0 %v73
    %193 = vmatpush.msra.mxu0 %v72
    %194 = vmatmul.f32.gmra.mxu0 %v176
    %v195 = vpop.f32.mrf.mxu0
    %v196 = vadd.f32 0.0, %v195
    %197 = vdwg.mxu0
    %v198 = vadd.f32 %v174, %v196
    %v199 = vmul.f32 %v198, %v79
    %v200 = vtanh.pop %v199
    %v201 = vmul.f32 %v79, %v200
    %v202 = vadd.f32 %v201, %v80
    %204 = vrot.lane.b32.xlu0 %v202, 96
    %v205 = vpop.permute.xlu0 %204
    %v207 = vmul.f32 %v202, %v205
    %208 = vrot.lane.b32.xlu0 %v202, 64
    %v209 = vpop.permute.xlu0 %208
    %v211 = vmul.f32 %v167, %v209
    %v212 = vadd.f32 %v207, %v211
    %213 = vrot.lane.b32.xlu0 %v202, 32
    %v214 = vpop.permute.xlu0 %213
    %v216 = vmul.f32 %v212, %v214
    %v217 = vtanh.pop %v216
    %s218 = scalar_lea.vmem [#allocation4], 24
    %v219 = vld [vmem:[%s218] sm:$0xff]
    %v221 = vsel %vm84, %v217, 0
    %223 = vmatpush.msra.mxu0 0.0
    %224 = vmatpush.msra.mxu0 0.0
    %225 = vmatpush.msra.mxu0 0.0
    %226 = vmatpush.msra.mxu0 0.0
    %227 = vmatpush.msra.mxu0 0.0
    %228 = vmatpush.msra.mxu0 0.0
    %229 = vmatpush.msra.mxu0 0.0
    %230 = vmatpush.msra.mxu0 0.0
    %231 = vmatpush.msra.mxu0 0.0
    %232 = vmatpush.msra.mxu0 0.0
    %233 = vmatpush.msra.mxu0 0.0
    %234 = vmatpush.msra.mxu0 0.0
    %235 = vmatpush.msra.mxu0 %v75
    %236 = vmatpush.msra.mxu0 %v74
    %237 = vmatpush.msra.mxu0 %v73
    %238 = vmatpush.msra.mxu0 %v72
    %239 = vmatmul.f32.gmra.mxu0 %v221
    %v240 = vpop.f32.mrf.mxu0
    %v241 = vadd.f32 0.0, %v240
    %242 = vdwg.mxu0
    %v243 = vadd.f32 %v219, %v241
    %v244 = vmul.f32 %v243, %v79
    %v245 = vtanh.pop %v244
    %v246 = vmul.f32 %v79, %v245
    %v247 = vadd.f32 %v246, %v80
    %249 = vrot.lane.b32.xlu0 %v247, 96
    %v250 = vpop.permute.xlu0 %249
    %v252 = vmul.f32 %v247, %v250
    %253 = vrot.lane.b32.xlu0 %v247, 64
    %v254 = vpop.permute.xlu0 %253
    %v256 = vmul.f32 %v212, %v254
    %v257 = vadd.f32 %v252, %v256
    %258 = vrot.lane.b32.xlu0 %v247, 32
    %v259 = vpop.permute.xlu0 %258
    %v261 = vmul.f32 %v257, %v259
    %v262 = vtanh.pop %v261
    %s263 = scalar_lea.vmem [#allocation4], 32
    %v264 = vld [vmem:[%s263] sm:$0xff]
    %v266 = vsel %vm84, %v262, 0
    %268 = vmatpush.msra.mxu0 0.0
    %269 = vmatpush.msra.mxu0 0.0
    %270 = vmatpush.msra.mxu0 0.0
    %271 = vmatpush.msra.mxu0 0.0
    %272 = vmatpush.msra.mxu0 0.0
    %273 = vmatpush.msra.mxu0 0.0
    %274 = vmatpush.msra.mxu0 0.0
    %275 = vmatpush.msra.mxu0 0.0
    %276 = vmatpush.msra.mxu0 0.0
    %277 = vmatpush.msra.mxu0 0.0
    %278 = vmatpush.msra.mxu0 0.0
    %279 = vmatpush.msra.mxu0 0.0
    %280 = vmatpush.msra.mxu0 %v75
    %281 = vmatpush.msra.mxu0 %v74
    %282 = vmatpush.msra.mxu0 %v73
    %283 = vmatpush.msra.mxu0 %v72
    %284 = vmatmul.f32.gmra.mxu0 %v266
    %v285 = vpop.f32.mrf.mxu0
    %v286 = vadd.f32 0.0, %v285
    %287 = vdwg.mxu0
    %v288 = vadd.f32 %v264, %v286
    %v289 = vmul.f32 %v288, %v79
    %v290 = vtanh.pop %v289
    %v291 = vmul.f32 %v79, %v290
    %v292 = vadd.f32 %v291, %v80
    %294 = vrot.lane.b32.xlu0 %v292, 96
    %v295 = vpop.permute.xlu0 %294
    %v297 = vmul.f32 %v292, %v295
    %298 = vrot.lane.b32.xlu0 %v292, 64
    %v299 = vpop.permute.xlu0 %298
    %v301 = vmul.f32 %v257, %v299
    %v302 = vadd.f32 %v297, %v301
    %303 = vrot.lane.b32.xlu0 %v292, 32
    %v304 = vpop.permute.xlu0 %303
    %v306 = vmul.f32 %v302, %v304
    %v307 = vtanh.pop %v306
    %s308 = scalar_lea.vmem [#allocation4], 40
    %v309 = vld [vmem:[%s308] sm:$0xff]
    %v311 = vsel %vm84, %v307, 0
    %313 = vmatpush.msra.mxu0 0.0
    %314 = vmatpush.msra.mxu0 0.0
    %315 = vmatpush.msra.mxu0 0.0
    %316 = vmatpush.msra.mxu0 0.0
    %317 = vmatpush.msra.mxu0 0.0
    %318 = vmatpush.msra.mxu0 0.0
    %319 = vmatpush.msra.mxu0 0.0
    %320 = vmatpush.msra.mxu0 0.0
    %321 = vmatpush.msra.mxu0 0.0
    %322 = vmatpush.msra.mxu0 0.0
    %323 = vmatpush.msra.mxu0 0.0
    %324 = vmatpush.msra.mxu0 0.0
    %325 = vmatpush.msra.mxu0 %v75
    %326 = vmatpush.msra.mxu0 %v74
    %327 = vmatpush.msra.mxu0 %v73
    %328 = vmatpush.msra.mxu0 %v72
    %329 = vmatmul.f32.gmra.mxu0 %v311
    %v330 = vpop.f32.mrf.mxu0
    %v331 = vadd.f32 0.0, %v330
    %332 = vdwg.mxu0
    %v333 = vadd.f32 %v309, %v331
    %v334 = vmul.f32 %v333, %v79
    %v335 = vtanh.pop %v334
    %v336 = vmul.f32 %v79, %v335
    %v337 = vadd.f32 %v336, %v80
    %339 = vrot.lane.b32.xlu0 %v337, 96
    %v340 = vpop.permute.xlu0 %339
    %v342 = vmul.f32 %v337, %v340
    %343 = vrot.lane.b32.xlu0 %v337, 64
    %v344 = vpop.permute.xlu0 %343
    %v346 = vmul.f32 %v302, %v344
    %v347 = vadd.f32 %v342, %v346
    %348 = vrot.lane.b32.xlu0 %v337, 32
    %v349 = vpop.permute.xlu0 %348
    %v351 = vmul.f32 %v347, %v349
    %v352 = vtanh.pop %v351
    %s353 = scalar_lea.vmem [#allocation4], 48
    %v354 = vld [vmem:[%s353] sm:$0xff]
    %v356 = vsel %vm84, %v352, 0
    %358 = vmatpush.msra.mxu0 0.0
    %359 = vmatpush.msra.mxu0 0.0
    %360 = vmatpush.msra.mxu0 0.0
    %361 = vmatpush.msra.mxu0 0.0
    %362 = vmatpush.msra.mxu0 0.0
    %363 = vmatpush.msra.mxu0 0.0
    %364 = vmatpush.msra.mxu0 0.0
    %365 = vmatpush.msra.mxu0 0.0
    %366 = vmatpush.msra.mxu0 0.0
    %367 = vmatpush.msra.mxu0 0.0
    %368 = vmatpush.msra.mxu0 0.0
    %369 = vmatpush.msra.mxu0 0.0
    %370 = vmatpush.msra.mxu0 %v75
    %371 = vmatpush.msra.mxu0 %v74
    %372 = vmatpush.msra.mxu0 %v73
    %373 = vmatpush.msra.mxu0 %v72
    %374 = vmatmul.f32.gmra.mxu0 %v356
    %v375 = vpop.f32.mrf.mxu0
    %v376 = vadd.f32 0.0, %v375
    %377 = vdwg.mxu0
    %v378 = vadd.f32 %v354, %v376
    %v379 = vmul.f32 %v378, %v79
    %v380 = vtanh.pop %v379
    %v381 = vmul.f32 %v79, %v380
    %v382 = vadd.f32 %v381, %v80
    %384 = vrot.lane.b32.xlu0 %v382, 96
    %v385 = vpop.permute.xlu0 %384
    %v387 = vmul.f32 %v382, %v385
    %388 = vrot.lane.b32.xlu0 %v382, 64
    %v389 = vpop.permute.xlu0 %388
    %v391 = vmul.f32 %v347, %v389
    %v392 = vadd.f32 %v387, %v391
    %393 = vrot.lane.b32.xlu0 %v382, 32
    %v394 = vpop.permute.xlu0 %393
    %v396 = vmul.f32 %v392, %v394
    %v397 = vtanh.pop %v396
    %s398 = scalar_lea.vmem [#allocation4], 56
    %v399 = vld [vmem:[%s398] sm:$0xff]
    %v401 = vsel %vm84, %v397, 0
    %403 = vmatpush.msra.mxu0 0.0
    %404 = vmatpush.msra.mxu0 0.0
    %405 = vmatpush.msra.mxu0 0.0
    %406 = vmatpush.msra.mxu0 0.0
    %407 = vmatpush.msra.mxu0 0.0
    %408 = vmatpush.msra.mxu0 0.0
    %409 = vmatpush.msra.mxu0 0.0
    %410 = vmatpush.msra.mxu0 0.0
    %411 = vmatpush.msra.mxu0 0.0
    %412 = vmatpush.msra.mxu0 0.0
    %413 = vmatpush.msra.mxu0 0.0
    %414 = vmatpush.msra.mxu0 0.0
    %415 = vmatpush.msra.mxu0 %v75
    %416 = vmatpush.msra.mxu0 %v74
    %417 = vmatpush.msra.mxu0 %v73
    %418 = vmatpush.msra.mxu0 %v72
    %419 = vmatmul.f32.gmra.mxu0 %v401
    %v420 = vpop.f32.mrf.mxu0
    %v421 = vadd.f32 0.0, %v420
    %422 = vdwg.mxu0
    %v423 = vadd.f32 %v399, %v421
    %v424 = vmul.f32 %v423, %v79
    %v425 = vtanh.pop %v424
    %v426 = vmul.f32 %v79, %v425
    %v427 = vadd.f32 %v426, %v80
    %429 = vrot.lane.b32.xlu0 %v427, 96
    %v430 = vpop.permute.xlu0 %429
    %v432 = vmul.f32 %v427, %v430
    %433 = vrot.lane.b32.xlu0 %v427, 64
    %v434 = vpop.permute.xlu0 %433
    %v436 = vmul.f32 %v392, %v434
    %v437 = vadd.f32 %v432, %v436
    %438 = vrot.lane.b32.xlu0 %v427, 32
    %v439 = vpop.permute.xlu0 %438
    %v441 = vmul.f32 %v437, %v439
    %v442 = vtanh.pop %v441
    %443 = vst.msk [vmem:[#allocation2] sm:$0xff] %vm84, %v442
    %444 = vst.msk [vmem:[#allocation3] sm:$0xff] %vm84, %v437
    // Predicated region
    $region34: #{tpu_custom_call.1} parent=1 // pred_check
      %p445 = pneg %p65
    $region35: #{tpu_custom_call.1} parent=1 // pred_check_branch
      %447 = sbr.rel (%p445) target = $region37
    $region36: #{tpu_custom_call.1} parent=1 // pred_region
      %v448 = vld [vmem:[#allocation9] sm:$0xff]
      %v449 = vld [vmem:[#allocation9 + $0x8] sm:$0xff]
      %v450 = vld [vmem:[#allocation9 + $0x10] sm:$0xff]
      %v451 = vld [vmem:[#allocation9 + $0x18] sm:$0xff]
      %v452 = vld [vmem:[%s3] sm:$0x1]
      %v454 = vperm.slane %v452, 0
      %v457 = vsel %vm84, %v442, 0
      %459 = vmatpush.msra.mxu0 0.0
      %460 = vmatpush.msra.mxu0 0.0
      %461 = vmatpush.msra.mxu0 0.0
      %462 = vmatpush.msra.mxu0 0.0
      %463 = vmatpush.msra.mxu0 0.0
      %464 = vmatpush.msra.mxu0 0.0
      %465 = vmatpush.msra.mxu0 0.0
      %466 = vmatpush.msra.mxu0 0.0
      %467 = vmatpush.msra.mxu0 0.0
      %468 = vmatpush.msra.mxu0 0.0
      %469 = vmatpush.msra.mxu0 0.0
      %470 = vmatpush.msra.mxu0 0.0
      %471 = vmatpush.msra.mxu0 %v451
      %472 = vmatpush.msra.mxu0 %v450
      %473 = vmatpush.msra.mxu0 %v449
      %474 = vmatpush.msra.mxu0 %v448
      %475 = vmatmul.f32.gmra.mxu0 %v457
      %v476 = vpop.f32.mrf.mxu0
      %v477 = vadd.f32 %v454, %v476
      %478 = vdwg.mxu0
      %479 = vst [vmem:[#allocation10] sm:$0xff] %v477
    $region37: #{tpu_custom_call.1} parent=1 // pred_fallthru
      _
    // Predicated region
    $region38: #{tpu_custom_call.1} parent=1 // pred_check
      _
    $region39: #{tpu_custom_call.1} parent=1 // pred_check_branch
      %481 = sbr.rel (0) target = $region41
    $region40: #{tpu_custom_call.1} parent=1 // pred_region
      %483 = vsyncadd [#allocation6], 0
      %s485 = sshll.u32 [#allocation10], 4
      %s486 = int_to_ptr.vmem [resolvable:$true] %s485
      %s487 = sshll.u32 %s4, 4
      %s488 = int_to_ptr.hbm [resolvable:$true] %s487
      %490 = dma.vmem_to_hbm [thread:$0]  %s486, 128, %s488, [#allocation6]
    $region41: #{tpu_custom_call.1} parent=1 // pred_fallthru
      _
    // Predicated region
    $region42: #{tpu_custom_call.1} parent=1 // pred_check
      _
    $region43: #{tpu_custom_call.1} parent=1 // pred_check_branch
      %492 = sbr.rel (0) target = $region45
    $region44: #{tpu_custom_call.1} parent=1 // pred_region
      %494 = dma.done [#allocation6], 128
    $region45: #{tpu_custom_call.1} parent=1 // pred_fallthru
      _
    %495 = vsyncpa [#allocation5], 1
    %496 = vsyncpa [#allocation8], 1
    %497 = vsyncpa [#allocation6], 1

</llo_original>
